<compile_context>
chip_gen: v7x
topology: tpu7x:2x2x1
jax: 0.10.0
libtpu: 0.0.40
codegen_flags: <defaults>
</compile_context>

<pallas_src>
import jax
import jax.numpy as jnp
from jax import lax
from jax.experimental import pallas as pl
from jax.experimental.pallas import tpu as pltpu


def _pick_block_batch(B):
    """Images per grid step: as large as possible (<=8) to raise the matmul M
    dim and amortize per-step overhead, while keeping >= 2 grid steps when
    possible so both v7x TensorCores get work."""
    candidates = [d for d in range(1, B + 1) if B % d == 0 and d <= 8]
    two_step = [d for d in candidates if B // d >= 2]
    return max(two_step) if two_step else max(candidates)


def _banded_weights(w_hwio, W):
    """Fold the 3 dx taps + channel contraction + W-direction SAME padding of a
    3x3 conv into per-dy banded matrices.

    w_hwio: (3, 3, Ci, Co)  ->  (3, W*Ci, W*Co) with
      band[dy, wi*Ci+ci, wo*Co+co] = w[dy, wi-wo+1, ci, co] if |wi-wo|<=1 else 0
    so  out[h, wo, co] = sum_dy  x[h+dy-1, :, :].flatten() @ band[dy][:, wo*Co+co].
    """
    Kh, Kw, Ci, Co = w_hwio.shape
    wi = jnp.arange(W)[:, None]                    # input column
    wo = jnp.arange(W)[None, :]                    # output column
    dx = wi - wo + (Kw // 2)                       # tap index
    valid = (dx >= 0) & (dx < Kw)
    dxc = jnp.clip(dx, 0, Kw - 1)
    band = w_hwio[:, dxc, :, :]                    # (Kh, W, W, Ci, Co)
    band = band * valid[None, :, :, None, None].astype(w_hwio.dtype)
    band = jnp.transpose(band, (0, 1, 3, 2, 4))    # (Kh, W, Ci, W, Co)
    return band.reshape(Kh, W * Ci, W * Co)


def _conv3x3_rows(pad_ref, bnd_ref, H):
    """3x3 SAME conv on a row-padded, lane-folded slab.

    pad_ref : (Bt, H+2, W*Ci) bf16 scratch; rows 0 and H+1 are zero (H halo).
    bnd_ref : (3, W*Ci, W*Co) bf16 banded weights (dx taps + W halo folded in).
    returns : (Bt*H, W*Co) f32
    """
    Bt, _, K = pad_ref.shape
    acc = None
    for dy in range(3):                                     # 3 deep matmuls
        lhs = pad_ref[:, dy:dy + H, :].reshape(Bt * H, K)   # row-shifted slab
        t = jnp.dot(lhs, bnd_ref[dy], preferred_element_type=jnp.float32)
        acc = t if acc is None else acc + t                 # first dot = init
    return acc


def basic_block_kernel(x_ref, bnd1_ref, bnd2_ref, out_ref, xpad_ref, hpad_ref):
    """Fused conv3x3 -> ReLU -> conv3x3 -> +shortcut -> ReLU for Bt images.

    x_ref    : (Bt, H, W*Cin)       bf16 lane-folded input block
    bnd1_ref : (3, W*Cin, W*Cmid)   bf16 banded weights, VMEM-resident
    bnd2_ref : (3, W*Cmid, W*Cout)  bf16 banded weights, VMEM-resident
    out_ref  : (Bt, H, W*Cout)      f32 output block
    xpad_ref : VMEM (Bt, H+2, W*Cin)  bf16  -- H-padded conv1 input
    hpad_ref : VMEM (Bt, H+2, W*Cmid) bf16  -- H-padded conv2 input
    """
    Bt, H, WCin = x_ref.shape
    WCmid = bnd1_ref.shape[2]
    WCout = bnd2_ref.shape[2]
    Hp = H + 2

    # H-direction SAME halo: zero only the 2 halo rows of each scratch.  Kept
    # per-step (stateless) so the "parallel" batch axis is safe on v7x's two
    # TensorCores; on single-core v5e/v6e this could be hoisted behind
    # @pl.when(pl.program_id(0) == 0).
    xpad_ref[:, 0:1, :] = jnp.zeros((Bt, 1, WCin), xpad_ref.dtype)
    xpad_ref[:, Hp - 1:Hp, :] = jnp.zeros((Bt, 1, WCin), xpad_ref.dtype)
    hpad_ref[:, 0:1, :] = jnp.zeros((Bt, 1, WCmid), hpad_ref.dtype)
    hpad_ref[:, Hp - 1:Hp, :] = jnp.zeros((Bt, 1, WCmid), hpad_ref.dtype)

    # conv1 input (x is NOT kept live across the convs; shortcut re-reads x_ref).
    xpad_ref[:, 1:1 + H, :] = x_ref[...]

    # ---- conv1 -> act1 (ReLU) ----
    acc1 = _conv3x3_rows(xpad_ref, bnd1_ref, H)             # (Bt*H, W*Cmid) f32
    hpad_ref[:, 1:1 + H, :] = (
        jnp.maximum(acc1, 0.0).reshape(Bt, H, WCmid).astype(hpad_ref.dtype))

    # ---- conv2 ----
    acc2 = _conv3x3_rows(hpad_ref, bnd2_ref, H)             # (Bt*H, W*Cout) f32

    # ---- identity shortcut (stride=1, downsample=None) + act2 (ReLU) ----
    shortcut = x_ref[...].reshape(Bt * H, WCout).astype(jnp.float32)
    out_ref[...] = (jnp.maximum(acc2 + shortcut, 0.0)
                    .reshape(Bt, H, WCout).astype(out_ref.dtype))


@jax.jit
def basic_block_sub(x_nchw, w1_hwio, w2_hwio):
    """x_nchw: (B, Cin, H, W) -> (B, Cout, H, W); weights are 3x3 HWIO."""
    B, Cin, H, W = x_nchw.shape
    Cmid = w1_hwio.shape[3]
    Cout = w2_hwio.shape[3]
    if Cin != Cout:
        raise ValueError("identity shortcut requires Cin == Cout "
                         "(downsample is None in this configuration)")

    # NCHW -> NHWC -> lane-folded (B, H, W*Cin) slab, bf16 MXU operands.
    x = (jnp.transpose(x_nchw, (0, 2, 3, 1))
         .reshape(B, H, W * Cin).astype(jnp.bfloat16))
    bnd1 = _banded_weights(w1_hwio, W).astype(jnp.bfloat16)   # (3, W*Cin, W*Cmid)
    bnd2 = _banded_weights(w2_hwio, W).astype(jnp.bfloat16)   # (3, W*Cmid, W*Cout)

    Bt = _pick_block_batch(B)
    grid = (B // Bt,)

    out = pl.pallas_call(
        basic_block_kernel,
        out_shape=jax.ShapeDtypeStruct((B, H, W * Cout), x_nchw.dtype),
        grid=grid,                                       # Bt images per step
        in_specs=[
            # Batch-blocked input slab; auto double-buffered across steps.
            pl.BlockSpec((Bt, H, W * Cin), lambda b: (b, 0, 0)),
            # Weights: constant index_map -> stay resident in VMEM.
            pl.BlockSpec((3, W * Cin, W * Cmid), lambda b: (0, 0, 0)),
            pl.BlockSpec((3, W * Cmid, W * Cout), lambda b: (0, 0, 0)),
        ],
        out_specs=pl.BlockSpec((Bt, H, W * Cout), lambda b: (b, 0, 0)),
        scratch_shapes=[
            pltpu.VMEM((Bt, H + 2, W * Cin), jnp.bfloat16),    # padded conv1 in
            pltpu.VMEM((Bt, H + 2, W * Cmid), jnp.bfloat16),   # padded conv2 in
        ],
        compiler_params=pltpu.CompilerParams(
            dimension_semantics=("parallel",),           # megacore on v7x
        ),
    )(x, bnd1, bnd2)

    out = out.reshape(B, H, W, Cout)                     # un-fold lanes
    return jnp.transpose(out, (0, 3, 1, 2))              # NHWC -> NCHW


def _reference(x_nchw, w1_hwio, w2_hwio):
    """Pure-JAX reference with the same bf16-operand / f32-accumulate numerics
    (shortcut uses the bf16-rounded input, matching the kernel's bf16 DMA)."""
    x = jnp.transpose(x_nchw, (0, 2, 3, 1))
    xb = x.astype(jnp.bfloat16)
    w1 = w1_hwio.astype(jnp.bfloat16)
    w2 = w2_hwio.astype(jnp.bfloat16)
    dn = lax.conv_dimension_numbers(x.shape, w1_hwio.shape, ("NHWC", "HWIO", "NHWC"))
    h = lax.conv_general_dilated(xb, w1, (1, 1), "SAME", dimension_numbers=dn,
                                 preferred_element_type=jnp.float32)
    h = jnp.maximum(h, 0.0).astype(jnp.bfloat16)
    y = lax.conv_general_dilated(h, w2, (1, 1), "SAME", dimension_numbers=dn,
                                 preferred_element_type=jnp.float32)
    y = jnp.maximum(y + xb.astype(jnp.float32), 0.0)
    return jnp.transpose(y, (0, 3, 1, 2)).astype(x_nchw.dtype)


if __name__ == "__main__":
    # Small shapes consistent with BasicBlockSub(inplanes=4, planes=4, stride=1).
    # B=4 exercises both batch-blocking (Bt=2) and a 2-step "parallel" grid.
    B, C, H, W = 4, 4, 16, 16
    key = jax.random.PRNGKey(0)
    kx, k1, k2 = jax.random.split(key, 3)

    x = jax.random.normal(kx, (B, C, H, W), dtype=jnp.float32)
    # Deterministic kaiming-ish init, HWIO layout, no bias (ResNet convention).
    fan_in = 3 * 3 * C
    w1 = jax.random.normal(k1, (3, 3, C, C), dtype=jnp.float32) * (2.0 / fan_in) ** 0.5
    w2 = jax.random.normal(k2, (3, 3, C, C), dtype=jnp.float32) * (2.0 / fan_in) ** 0.5

    out = jax.block_until_ready(basic_block_sub(x, w1, w2))
    ref = jax.block_until_ready(_reference(x, w1, w2))

    assert out.shape == (B, C, H, W)
    assert out.dtype == x.dtype
    max_err = float(jnp.max(jnp.abs(out - ref)))
    assert jnp.allclose(out, ref, atol=2e-2, rtol=2e-2), (
        f"mismatch vs reference, max|diff|={max_err}")

    print("KERNEL_OK")
</pallas_src>

<mosaic_0001>
module attributes {stable_mosaic.version = 11 : i64} {
  func.func @basic_block_kernel(%arg0: i32, %arg1: memref<2x16x64xbf16, #tpu.memory_space<vmem>>, %arg2: memref<3x64x64xbf16, #tpu.memory_space<vmem>>, %arg3: memref<3x64x64xbf16, #tpu.memory_space<vmem>>, %arg4: memref<2x16x64xf32, #tpu.memory_space<vmem>>, %arg5: memref<2x18x64xbf16, #tpu.memory_space<vmem>>, %arg6: memref<2x18x64xbf16, #tpu.memory_space<vmem>>) attributes {dimension_semantics = [#tpu.dimension_semantics<parallel>], iteration_bounds = array<i64: 2>, scalar_prefetch = 0 : i64, scratch_operands = 2 : i64, tpu.core_type = #tpu.core_type<tc>, window_params = [{transform_indices = @transform_0, window_bounds = array<i64: 2, 16, 64>}, {pipeline_mode = #tpu.pipeline_mode<synchronous>, transform_indices = @transform_1, window_bounds = array<i64: 3, 64, 64>}, {pipeline_mode = #tpu.pipeline_mode<synchronous>, transform_indices = @transform_2, window_bounds = array<i64: 3, 64, 64>}, {transform_indices = @transform_3, window_bounds = array<i64: 2, 16, 64>}]} {
    %cst = arith.constant 0.000000e+00 : bf16
    %0 = vector.broadcast %cst : bf16 to vector<2x1x64xbf16>
    %c0 = arith.constant 0 : index
    %c0_0 = arith.constant 0 : index
    %c0_1 = arith.constant 0 : index
    %1 = vector.load %arg5[%c0, %c0_0, %c0_1] : memref<2x18x64xbf16, #tpu.memory_space<vmem>>, vector<2x1x64xbf16>
    tpu.vector_store %arg5[%c0, %c0_0, %c0_1], %0 {strides = array<i32>} : memref<2x18x64xbf16, #tpu.memory_space<vmem>>, vector<2x1x64xbf16>,
    %cst_2 = arith.constant 0.000000e+00 : bf16
    %2 = vector.broadcast %cst_2 : bf16 to vector<2x1x64xbf16>
    %c0_3 = arith.constant 0 : index
    %c17 = arith.constant 17 : index
    %c0_4 = arith.constant 0 : index
    %3 = vector.load %arg5[%c0_3, %c17, %c0_4] : memref<2x18x64xbf16, #tpu.memory_space<vmem>>, vector<2x1x64xbf16>
    tpu.vector_store %arg5[%c0_3, %c17, %c0_4], %2 {strides = array<i32>} : memref<2x18x64xbf16, #tpu.memory_space<vmem>>, vector<2x1x64xbf16>,
    %cst_5 = arith.constant 0.000000e+00 : bf16
    %4 = vector.broadcast %cst_5 : bf16 to vector<2x1x64xbf16>
    %c0_6 = arith.constant 0 : index
    %c0_7 = arith.constant 0 : index
    %c0_8 = arith.constant 0 : index
    %5 = vector.load %arg6[%c0_6, %c0_7, %c0_8] : memref<2x18x64xbf16, #tpu.memory_space<vmem>>, vector<2x1x64xbf16>
    tpu.vector_store %arg6[%c0_6, %c0_7, %c0_8], %4 {strides = array<i32>} : memref<2x18x64xbf16, #tpu.memory_space<vmem>>, vector<2x1x64xbf16>,
    %cst_9 = arith.constant 0.000000e+00 : bf16
    %6 = vector.broadcast %cst_9 : bf16 to vector<2x1x64xbf16>
    %c0_10 = arith.constant 0 : index
    %c17_11 = arith.constant 17 : index
    %c0_12 = arith.constant 0 : index
    %7 = vector.load %arg6[%c0_10, %c17_11, %c0_12] : memref<2x18x64xbf16, #tpu.memory_space<vmem>>, vector<2x1x64xbf16>
    tpu.vector_store %arg6[%c0_10, %c17_11, %c0_12], %6 {strides = array<i32>} : memref<2x18x64xbf16, #tpu.memory_space<vmem>>, vector<2x1x64xbf16>,
    %c0_13 = arith.constant 0 : index
    %c0_14 = arith.constant 0 : index
    %c0_15 = arith.constant 0 : index
    %8 = vector.load %arg1[%c0_13, %c0_14, %c0_15] : memref<2x16x64xbf16, #tpu.memory_space<vmem>>, vector<2x16x64xbf16>
    %c0_16 = arith.constant 0 : index
    %c1 = arith.constant 1 : index
    %c0_17 = arith.constant 0 : index
    %9 = vector.load %arg5[%c0_16, %c1, %c0_17] : memref<2x18x64xbf16, #tpu.memory_space<vmem>>, vector<2x16x64xbf16>
    tpu.vector_store %arg5[%c0_16, %c1, %c0_17], %8 {strides = array<i32>} : memref<2x18x64xbf16, #tpu.memory_space<vmem>>, vector<2x16x64xbf16>,
    %c0_18 = arith.constant 0 : index
    %c0_19 = arith.constant 0 : index
    %c0_20 = arith.constant 0 : index
    %10 = vector.load %arg5[%c0_18, %c0_19, %c0_20] : memref<2x18x64xbf16, #tpu.memory_space<vmem>>, vector<2x16x64xbf16>
    %11 = vector.shape_cast %10 : vector<2x16x64xbf16> to vector<32x64xbf16>
    %c0_21 = arith.constant 0 : index
    %c0_22 = arith.constant 0 : index
    %c0_23 = arith.constant 0 : index
    %12 = vector.load %arg2[%c0_21, %c0_22, %c0_23] : memref<3x64x64xbf16, #tpu.memory_space<vmem>>, vector<1x64x64xbf16>
    %13 = vector.shape_cast %12 : vector<1x64x64xbf16> to vector<64x64xbf16>
    %cst_24 = arith.constant dense<0.000000e+00> : vector<32x64xf32>
    %14 = tpu.matmul %11, %13, %cst_24 {dimension_numbers = #tpu.dot_dimension_numbers<[1], [0], [0], [1], [0, 0, 1, 1], [], []>} : vector<32x64xbf16>, vector<64x64xbf16>, vector<32x64xf32> -> vector<32x64xf32>
    %c0_25 = arith.constant 0 : index
    %c1_26 = arith.constant 1 : index
    %c0_27 = arith.constant 0 : index
    %15 = vector.load %arg5[%c0_25, %c1_26, %c0_27] : memref<2x18x64xbf16, #tpu.memory_space<vmem>>, vector<2x16x64xbf16>
    %16 = vector.shape_cast %15 : vector<2x16x64xbf16> to vector<32x64xbf16>
    %c1_28 = arith.constant 1 : index
    %c0_29 = arith.constant 0 : index
    %c0_30 = arith.constant 0 : index
    %17 = vector.load %arg2[%c1_28, %c0_29, %c0_30] : memref<3x64x64xbf16, #tpu.memory_space<vmem>>, vector<1x64x64xbf16>
    %18 = vector.shape_cast %17 : vector<1x64x64xbf16> to vector<64x64xbf16>
    %cst_31 = arith.constant dense<0.000000e+00> : vector<32x64xf32>
    %19 = tpu.matmul %16, %18, %cst_31 {dimension_numbers = #tpu.dot_dimension_numbers<[1], [0], [0], [1], [0, 0, 1, 1], [], []>} : vector<32x64xbf16>, vector<64x64xbf16>, vector<32x64xf32> -> vector<32x64xf32>
    %20 = arith.addf %14, %19 : vector<32x64xf32>
    %c0_32 = arith.constant 0 : index
    %c2 = arith.constant 2 : index
    %c0_33 = arith.constant 0 : index
    %21 = vector.load %arg5[%c0_32, %c2, %c0_33] : memref<2x18x64xbf16, #tpu.memory_space<vmem>>, vector<2x16x64xbf16>
    %22 = vector.shape_cast %21 : vector<2x16x64xbf16> to vector<32x64xbf16>
    %c2_34 = arith.constant 2 : index
    %c0_35 = arith.constant 0 : index
    %c0_36 = arith.constant 0 : index
    %23 = vector.load %arg2[%c2_34, %c0_35, %c0_36] : memref<3x64x64xbf16, #tpu.memory_space<vmem>>, vector<1x64x64xbf16>
    %24 = vector.shape_cast %23 : vector<1x64x64xbf16> to vector<64x64xbf16>
    %cst_37 = arith.constant dense<0.000000e+00> : vector<32x64xf32>
    %25 = tpu.matmul %22, %24, %cst_37 {dimension_numbers = #tpu.dot_dimension_numbers<[1], [0], [0], [1], [0, 0, 1, 1], [], []>} : vector<32x64xbf16>, vector<64x64xbf16>, vector<32x64xf32> -> vector<32x64xf32>
    %26 = arith.addf %20, %25 : vector<32x64xf32>
    %cst_38 = arith.constant 0.000000e+00 : f32
    %27 = vector.broadcast %cst_38 : f32 to vector<32x64xf32>
    %28 = arith.maximumf %26, %27 : vector<32x64xf32>
    %29 = vector.shape_cast %28 : vector<32x64xf32> to vector<2x16x64xf32>
    %30 = arith.truncf %29 : vector<2x16x64xf32> to vector<2x16x64xbf16>
    %c0_39 = arith.constant 0 : index
    %c1_40 = arith.constant 1 : index
    %c0_41 = arith.constant 0 : index
    %31 = vector.load %arg6[%c0_39, %c1_40, %c0_41] : memref<2x18x64xbf16, #tpu.memory_space<vmem>>, vector<2x16x64xbf16>
    tpu.vector_store %arg6[%c0_39, %c1_40, %c0_41], %30 {strides = array<i32>} : memref<2x18x64xbf16, #tpu.memory_space<vmem>>, vector<2x16x64xbf16>,
    %c0_42 = arith.constant 0 : index
    %c0_43 = arith.constant 0 : index
    %c0_44 = arith.constant 0 : index
    %32 = vector.load %arg6[%c0_42, %c0_43, %c0_44] : memref<2x18x64xbf16, #tpu.memory_space<vmem>>, vector<2x16x64xbf16>
    %33 = vector.shape_cast %32 : vector<2x16x64xbf16> to vector<32x64xbf16>
    %c0_45 = arith.constant 0 : index
    %c0_46 = arith.constant 0 : index
    %c0_47 = arith.constant 0 : index
    %34 = vector.load %arg3[%c0_45, %c0_46, %c0_47] : memref<3x64x64xbf16, #tpu.memory_space<vmem>>, vector<1x64x64xbf16>
    %35 = vector.shape_cast %34 : vector<1x64x64xbf16> to vector<64x64xbf16>
    %cst_48 = arith.constant dense<0.000000e+00> : vector<32x64xf32>
    %36 = tpu.matmul %33, %35, %cst_48 {dimension_numbers = #tpu.dot_dimension_numbers<[1], [0], [0], [1], [0, 0, 1, 1], [], []>} : vector<32x64xbf16>, vector<64x64xbf16>, vector<32x64xf32> -> vector<32x64xf32>
    %c0_49 = arith.constant 0 : index
    %c1_50 = arith.constant 1 : index
    %c0_51 = arith.constant 0 : index
    %37 = vector.load %arg6[%c0_49, %c1_50, %c0_51] : memref<2x18x64xbf16, #tpu.memory_space<vmem>>, vector<2x16x64xbf16>
    %38 = vector.shape_cast %37 : vector<2x16x64xbf16> to vector<32x64xbf16>
    %c1_52 = arith.constant 1 : index
    %c0_53 = arith.constant 0 : index
    %c0_54 = arith.constant 0 : index
    %39 = vector.load %arg3[%c1_52, %c0_53, %c0_54] : memref<3x64x64xbf16, #tpu.memory_space<vmem>>, vector<1x64x64xbf16>
    %40 = vector.shape_cast %39 : vector<1x64x64xbf16> to vector<64x64xbf16>
    %cst_55 = arith.constant dense<0.000000e+00> : vector<32x64xf32>
    %41 = tpu.matmul %38, %40, %cst_55 {dimension_numbers = #tpu.dot_dimension_numbers<[1], [0], [0], [1], [0, 0, 1, 1], [], []>} : vector<32x64xbf16>, vector<64x64xbf16>, vector<32x64xf32> -> vector<32x64xf32>
    %42 = arith.addf %36, %41 : vector<32x64xf32>
    %c0_56 = arith.constant 0 : index
    %c2_57 = arith.constant 2 : index
    %c0_58 = arith.constant 0 : index
    %43 = vector.load %arg6[%c0_56, %c2_57, %c0_58] : memref<2x18x64xbf16, #tpu.memory_space<vmem>>, vector<2x16x64xbf16>
    %44 = vector.shape_cast %43 : vector<2x16x64xbf16> to vector<32x64xbf16>
    %c2_59 = arith.constant 2 : index
    %c0_60 = arith.constant 0 : index
    %c0_61 = arith.constant 0 : index
    %45 = vector.load %arg3[%c2_59, %c0_60, %c0_61] : memref<3x64x64xbf16, #tpu.memory_space<vmem>>, vector<1x64x64xbf16>
    %46 = vector.shape_cast %45 : vector<1x64x64xbf16> to vector<64x64xbf16>
    %cst_62 = arith.constant dense<0.000000e+00> : vector<32x64xf32>
    %47 = tpu.matmul %44, %46, %cst_62 {dimension_numbers = #tpu.dot_dimension_numbers<[1], [0], [0], [1], [0, 0, 1, 1], [], []>} : vector<32x64xbf16>, vector<64x64xbf16>, vector<32x64xf32> -> vector<32x64xf32>
    %48 = arith.addf %42, %47 : vector<32x64xf32>
    %c0_63 = arith.constant 0 : index
    %c0_64 = arith.constant 0 : index
    %c0_65 = arith.constant 0 : index
    %49 = vector.load %arg1[%c0_63, %c0_64, %c0_65] : memref<2x16x64xbf16, #tpu.memory_space<vmem>>, vector<2x16x64xbf16>
    %50 = vector.shape_cast %49 : vector<2x16x64xbf16> to vector<32x64xbf16>
    %51 = arith.extf %50 : vector<32x64xbf16> to vector<32x64xf32>
    %52 = arith.addf %48, %51 : vector<32x64xf32>
    %cst_66 = arith.constant 0.000000e+00 : f32
    %53 = vector.broadcast %cst_66 : f32 to vector<32x64xf32>
    %54 = arith.maximumf %52, %53 : vector<32x64xf32>
    %55 = vector.shape_cast %54 : vector<32x64xf32> to vector<2x16x64xf32>
    %c0_67 = arith.constant 0 : index
    %c0_68 = arith.constant 0 : index
    %c0_69 = arith.constant 0 : index
    %56 = vector.load %arg4[%c0_67, %c0_68, %c0_69] : memref<2x16x64xf32, #tpu.memory_space<vmem>>, vector<2x16x64xf32>
    tpu.vector_store %arg4[%c0_67, %c0_68, %c0_69], %55 {strides = array<i32>} : memref<2x16x64xf32, #tpu.memory_space<vmem>>, vector<2x16x64xf32>,
    return
  }
  func.func @transform_0(%arg0: i32) -> (i32, i32, i32) {
    %c0_i32 = arith.constant 0 : i32
    %c0_i32_0 = arith.constant 0 : i32
    %c0_i32_1 = arith.constant 0 : i32
    return %arg0, %c0_i32, %c0_i32_0 : i32, i32, i32
  }
  func.func @transform_1(%arg0: i32) -> (i32, i32, i32) {
    %c0_i32 = arith.constant 0 : i32
    %c0_i32_0 = arith.constant 0 : i32
    %c0_i32_1 = arith.constant 0 : i32
    %c0_i32_2 = arith.constant 0 : i32
    return %c0_i32, %c0_i32_0, %c0_i32_1 : i32, i32, i32
  }
  func.func @transform_2(%arg0: i32) -> (i32, i32, i32) {
    %c0_i32 = arith.constant 0 : i32
    %c0_i32_0 = arith.constant 0 : i32
    %c0_i32_1 = arith.constant 0 : i32
    %c0_i32_2 = arith.constant 0 : i32
    return %c0_i32, %c0_i32_0, %c0_i32_1 : i32, i32, i32
  }
  func.func @transform_3(%arg0: i32) -> (i32, i32, i32) {
    %c0_i32 = arith.constant 0 : i32
    %c0_i32_0 = arith.constant 0 : i32
    %c0_i32_1 = arith.constant 0 : i32
    return %arg0, %c0_i32, %c0_i32_0 : i32, i32, i32
  }
}

</mosaic_0001>

<llo_original>
// kernel: basic_block_sub.1
$region0: #{basic_block_sub.1}
  #allocation0 [shape = 'u32[]', space=smem, size = 0x4, offset = 0x4, fixed_abs, tag = 'smem constant byte address 0x4 - core index']
  #allocation1 [shape = 'u32[144,128]{1,0:T(1,128)}', space=vmem, size = 0x12000, scoped, tag = 'internal scratch']
  #allocation2 [shape = 'bf16[2,18,64]{2,1,0:T(8,128)(2,1)}', space=vmem, size = 0x3000, scoped, tag = 'scratch operand']
  #allocation3 [shape = 'bf16[2,18,64]{2,1,0:T(8,128)(2,1)}', space=vmem, size = 0x3000, scoped, tag = 'scratch operand']
  %s0 = inlined_call_operand.vmem [shape: bf16[4,16,64], index: 0, kind: input, shape index: {}]
  %s1 = inlined_call_operand.vmem [shape: bf16[3,64,64], index: 1, kind: input, shape index: {}]
  %s2 = inlined_call_operand.vmem [shape: bf16[3,64,64], index: 2, kind: input, shape index: {}]
  %s3 = inlined_call_operand.vmem [shape: f32[4,16,64], index: 3, kind: output, shape index: {}]
  %s4 = sld [smem:[#allocation0]]
  $region45: #{basic_block_sub.1} parent=0
    _
  %s6 = ssub.s32 1, %s4
  %s7 = scalar_select 0, %s6, %s4
  loop: start=0, step=1, limit=4
  $region2: #{basic_block_sub.1} parent=0 // loop_pre_header
    _
  $region3: #{basic_block_sub.1} parent=0 // loop_header
    %s9 = sphi 0, %s13
    %p10 = scmp.ge.s32.totalorder %s9, 4
    %s19 = sphi 0, %s21
    %s22 = sphi 0, %s19
    %s23 = sphi 0, %s22
    %s39 = sphi 0, %s23
    %s43 = sphi 0, %s43
    %s45 = sphi 0, %s43
    %s46 = sphi 0, %s45
    %s60 = sphi 0, %s46
    %s64 = sphi 0, %s64
    %s66 = sphi 0, %s64
    %s67 = sphi 0, %s66
    %s81 = sphi 0, %s67
    %s87 = sphi 0, %s89
    %s90 = sphi 0, %s87
    %s91 = sphi 0, %s90
    %s107 = sphi 0, %s91
  $region4: #{basic_block_sub.1} parent=0 // loop_header_branch
    %12 = sbr.rel (%p10) target = $region8
  $region5: #{basic_block_sub.1} parent=0 // loop_body
    %s14 = ssub.s32 %s9, 1
    %s15 = ssub.s32 %s9, 2
    %s16 = sadd.s32 %s9, 1
    %s17 = ssub.s32 %s9, %s16
    %p18 = scmp.eq.s32.totalorder %s17, 0
    %s20 = sadd.s32 %s19, 1
    %s21 = scalar_select %p18, %s19, %s20
    %p24 = pneg %p18
    %p25 = scmp.eq.s32.totalorder %s9, 1
    %p26 = por %p24, %p25
    %p27 = scmp.ne.s32.totalorder %s19, %s22
    %p28 = scmp.eq.s32.totalorder %s9, 0
    %p29 = por %p27, %p28
    %p30 = scmp.ne.s32.totalorder %s19, %s22
    %p31 = scmp.eq.s32.totalorder %s14, 1
    %p32 = por %p30, %p31
    %p33 = scmp.ne.s32.totalorder %s22, %s23
    %p34 = scmp.eq.s32.totalorder %s14, 0
    %p35 = por %p33, %p34
    %p36 = scmp.ne.s32.totalorder %s22, %s23
    %p37 = scmp.eq.s32.totalorder %s15, 1
    %p38 = por %p36, %p37
    %p40 = scmp.ne.s32.totalorder %s23, %s39
    %p41 = scmp.eq.s32.totalorder %s15, 0
    %p42 = por %p40, %p41
    %s44 = sadd.s32 %s43, 1
    %p47 = scmp.eq.s32.totalorder %s9, 1
    %p48 = scmp.ne.s32.totalorder %s43, %s45
    %p49 = scmp.eq.s32.totalorder %s9, 0
    %p50 = por %p48, %p49
    %p51 = scmp.ne.s32.totalorder %s43, %s45
    %p52 = scmp.eq.s32.totalorder %s14, 1
    %p53 = por %p51, %p52
    %p54 = scmp.ne.s32.totalorder %s45, %s46
    %p55 = scmp.eq.s32.totalorder %s14, 0
    %p56 = por %p54, %p55
    %p57 = scmp.ne.s32.totalorder %s45, %s46
    %p58 = scmp.eq.s32.totalorder %s15, 1
    %p59 = por %p57, %p58
    %p61 = scmp.ne.s32.totalorder %s46, %s60
    %p62 = scmp.eq.s32.totalorder %s15, 0
    %p63 = por %p61, %p62
    %s65 = sadd.s32 %s64, 1
    %p68 = scmp.eq.s32.totalorder %s9, 1
    %p69 = scmp.ne.s32.totalorder %s64, %s66
    %p70 = scmp.eq.s32.totalorder %s9, 0
    %p71 = por %p69, %p70
    %p72 = scmp.ne.s32.totalorder %s64, %s66
    %p73 = scmp.eq.s32.totalorder %s14, 1
    %p74 = por %p72, %p73
    %p75 = scmp.ne.s32.totalorder %s66, %s67
    %p76 = scmp.eq.s32.totalorder %s14, 0
    %p77 = por %p75, %p76
    %p78 = scmp.ne.s32.totalorder %s66, %s67
    %p79 = scmp.eq.s32.totalorder %s15, 1
    %p80 = por %p78, %p79
    %p82 = scmp.ne.s32.totalorder %s67, %s81
    %p83 = scmp.eq.s32.totalorder %s15, 0
    %p84 = por %p82, %p83
    %s85 = ssub.s32 %s9, %s16
    %p86 = scmp.eq.s32.totalorder %s85, 0
    %s88 = sadd.s32 %s87, 1
    %s89 = scalar_select %p86, %s87, %s88
    %p92 = pneg %p86
    %p93 = scmp.eq.s32.totalorder %s9, 1
    %p94 = por %p92, %p93
    %p95 = scmp.ne.s32.totalorder %s87, %s90
    %p96 = scmp.eq.s32.totalorder %s9, 0
    %p97 = por %p95, %p96
    %p98 = scmp.ne.s32.totalorder %s87, %s90
    %p99 = scmp.eq.s32.totalorder %s14, 1
    %p100 = por %p98, %p99
    %p101 = scmp.ne.s32.totalorder %s90, %s91
    %p102 = scmp.eq.s32.totalorder %s14, 0
    %p103 = por %p101, %p102
    %p104 = scmp.ne.s32.totalorder %s90, %s91
    %p105 = scmp.eq.s32.totalorder %s15, 1
    %p106 = por %p104, %p105
    %p108 = scmp.ne.s32.totalorder %s91, %s107
    %p109 = scmp.eq.s32.totalorder %s15, 0
    %p110 = por %p108, %p109
    %p111 = scmp.le.s32.totalorder 1, %s9
    %p112 = scmp.lt.s32.totalorder %s9, 3
    %p113 = pnand %p111, %p112
    %p114 = pneg %p113
    // Predicated region
    $region9: #{basic_block_sub.1} parent=5 // pred_check
      _
    $region10: #{basic_block_sub.1} parent=5 // pred_check_branch
      %116 = sbr.rel (%p113) target = $region12
    $region11: #{basic_block_sub.1} parent=5 // pred_region
      %s117 = ssub.s32 %s9, 1
      // Predicated region
      $region13: #{basic_block_sub.1} parent=11 // pred_check
        %p118 = pneg %p56
      $region14: #{basic_block_sub.1} parent=11 // pred_check_branch
        %120 = sbr.rel (%p118) target = $region16
      $region15: #{basic_block_sub.1} parent=11 // pred_region
        _
      $region16: #{basic_block_sub.1} parent=11 // pred_fallthru
        _
      // Predicated region
      $region17: #{basic_block_sub.1} parent=11 // pred_check
        %p121 = pneg %p77
      $region18: #{basic_block_sub.1} parent=11 // pred_check_branch
        %123 = sbr.rel (%p121) target = $region20
      $region19: #{basic_block_sub.1} parent=11 // pred_region
        _
      $region20: #{basic_block_sub.1} parent=11 // pred_fallthru
        _
    $region12: #{basic_block_sub.1} parent=5 // pred_fallthru
      _
    %p124 = scmp.lt.s32.totalorder %s9, 2
    // Predicated region
    $region21: #{basic_block_sub.1} parent=5 // pred_check
      %p125 = pneg %p124
    $region22: #{basic_block_sub.1} parent=5 // pred_check_branch
      %127 = sbr.rel (%p125) target = $region24
    $region23: #{basic_block_sub.1} parent=5 // pred_region
      // Predicated region
      $region25: #{basic_block_sub.1} parent=23 // pred_check
        %p128 = pneg %p29
      $region26: #{basic_block_sub.1} parent=23 // pred_check_branch
        %130 = sbr.rel (%p128) target = $region28
      $region27: #{basic_block_sub.1} parent=23 // pred_region
        %s131 = smul.u32 2, %s9
        %p132 = scmp.lt.s32.totalorder %s131, 3
        %s133 = scalar_select %p132, %s131, 3
        %s134 = smul.addr %s133, 2
        %s135 = smul.addr %s134, 4
        %s136 = scalar_lea.vmem %s0, %s135
        %s137 = smul.u32 2, %s9
      $region28: #{basic_block_sub.1} parent=23 // pred_fallthru
        _
    $region24: #{basic_block_sub.1} parent=5 // pred_fallthru
      _
    %p138 = scmp.le.s32.totalorder 1, %s9
    %p139 = scmp.lt.s32.totalorder %s9, 3
    %p140 = pnand %p138, %p139
    %p141 = pneg %p140
    // Predicated region
    $region29: #{basic_block_sub.1} parent=5 // pred_check
      _
    $region30: #{basic_block_sub.1} parent=5 // pred_check_branch
      %143 = sbr.rel (%p140) target = $region32
    $region31: #{basic_block_sub.1} parent=5 // pred_region
      %s144 = ssub.s32 %s9, 1
      %s145 = smul.u32 2, %s14
      %p146 = scmp.lt.s32.totalorder %s145, 3
      %s147 = scalar_select %p146, %s145, 3
      %s148 = smul.addr %s147, 2
      %s149 = smul.addr %s148, 4
      %s150 = scalar_lea.vmem %s0, %s149
      %p151 = pneg %p35
      %p152 = pneg %p32
      %p153 = pneg %p56
      %p154 = pneg %p53
      %p155 = pneg %p77
      %p156 = pneg %p74
      %p157 = pneg %p103
      %p158 = pneg %p100
      %s159 = smul.u32 2, %s14
      %p160 = scmp.lt.s32.totalorder %s159, 3
      %s161 = scalar_select %p160, %s159, 3
      %s162 = smul.addr %s161, 2
      %s163 = smul.addr %s162, 8
      %s164 = scalar_lea.vmem %s3, %s163
      %s165 = smul.u32 2, %s14
      %p166 = scmp.lt.s32.totalorder %s165, 3
      %s167 = scalar_select %p166, %s165, 3
      %s168 = smul.addr %s167, 2
      %s169 = smul.addr %s168, 4
      %s170 = scalar_lea.vmem %s0, %s169
      %s171 = smul.u32 2, %s14
      %s172 = smul.u32 2, %s14
      %p173 = scmp.lt.s32.totalorder %s172, 3
      %s174 = scalar_select %p173, %s172, 3
      %s175 = smul.addr %s174, 2
      %s176 = smul.addr %s175, 8
      %s177 = scalar_lea.vmem %s3, %s176
      %s178 = smul.u32 2, %s14
      %vm180 = vcmask 516096
      %vm181 = vsmask.f32 256
      %vm182 = vmand %vm180, %vm181
      %v183 = vld [vmem:[#allocation2] sm:$0x1]
      %v184 = vsel %vm182, 0, %v183
      %185 = vst [vmem:[#allocation2] sm:$0x1] %v184
      %v186 = vld [vmem:[#allocation2 + $0xc] sm:$0x1]
      %v187 = vsel %vm182, 0, %v186
      %188 = vst [vmem:[#allocation2 + $0xc] sm:$0x1] %v187
      %vm189 = vsmask.f32 7938
      %vm190 = vmand %vm180, %vm189
      %v191 = vld [vmem:[#allocation2 + $0x8] sm:$0x1]
      %v192 = vsel %vm190, 0, %v191
      %193 = vst [vmem:[#allocation2 + $0x8] sm:$0x1] %v192
      %v194 = vld [vmem:[#allocation2 + $0x14] sm:$0x1]
      %v195 = vsel %vm190, 0, %v194
      %196 = vst [vmem:[#allocation2 + $0x14] sm:$0x1] %v195
      %v197 = vld [vmem:[#allocation3] sm:$0x1]
      %v198 = vsel %vm182, 0, %v197
      %199 = vst [vmem:[#allocation3] sm:$0x1] %v198
      %v200 = vld [vmem:[#allocation3 + $0xc] sm:$0x1]
      %v201 = vsel %vm182, 0, %v200
      %202 = vst [vmem:[#allocation3 + $0xc] sm:$0x1] %v201
      %v203 = vld [vmem:[#allocation3 + $0x8] sm:$0x1]
      %v204 = vsel %vm190, 0, %v203
      %205 = vst [vmem:[#allocation3 + $0x8] sm:$0x1] %v204
      %v206 = vld [vmem:[#allocation3 + $0x14] sm:$0x1]
      %v207 = vsel %vm190, 0, %v206
      %208 = vst [vmem:[#allocation3 + $0x14] sm:$0x1] %v207
      %v209 = vld [vmem:[%s170] sm:$0xf]
      %v210 = vld [vmem:[%s170 + $0x4] sm:$0xf]
      %v211 = vld [vmem:[%s170 + $0x8] sm:$0xf]
      %v212 = vld [vmem:[%s170 + $0xc] sm:$0xf]
      %vm213 = vsmask.f32 4368
      %vm214 = vmor %vm181, %vm213
      %v216 = vshrl.u32 %v209, 16
      %v218 = vrot.slane %v216, 7
      %v219 = vshll.u32 %v209, 16
      %v221 = vor.u32 %v218, %v219
      %v222 = vrot.slane %v218, 4
      %v224 = vshrl.u32 %v210, 16
      %v226 = vrot.slane %v224, 7
      %v227 = vshll.u32 %v210, 16
      %v229 = vor.u32 %v226, %v227
      %v230 = vsel %vm214, %v222, %v229
      %v231 = vrot.slane %v226, 4
      %v233 = vshrl.u32 %v211, 16
      %v235 = vrot.slane %v233, 7
      %v236 = vshll.u32 %v211, 16
      %v238 = vor.u32 %v235, %v236
      %v239 = vrot.slane %v235, 4
      %v241 = vshrl.u32 %v212, 16
      %v243 = vrot.slane %v241, 7
      %v244 = vshll.u32 %v212, 16
      %v246 = vor.u32 %v243, %v244
      %v247 = vsel %vm214, %v239, %v246
      %v248 = vrot.slane %v243, 4
      %vm255 = vcmask 519168
      %vm256 = vmand %vm255, %vm189
      %v257 = vld [vmem:[#allocation2] sm:$0xf]
      %v258 = vsel %vm256, %v221, %v257
      %259 = vst [vmem:[#allocation2] sm:$0xf] %v258
      %vm260 = vcmask 519168
      %261 = vst.msk [vmem:[#allocation2 + $0x4] sm:$0xf] %vm260, %v230
      %v262 = vld [vmem:[#allocation2 + $0x8] sm:$0x1]
      %v263 = vsel %vm182, %v231, %v262
      %264 = vst [vmem:[#allocation2 + $0x8] sm:$0x1] %v263
      %v265 = vld [vmem:[#allocation2 + $0xc] sm:$0xf]
      %v266 = vsel %vm256, %v238, %v265
      %267 = vst [vmem:[#allocation2 + $0xc] sm:$0xf] %v266
      %268 = vst.msk [vmem:[#allocation2 + $0x10] sm:$0xf] %vm260, %v247
      %v269 = vld [vmem:[#allocation2 + $0x14] sm:$0x1]
      %v270 = vsel %vm182, %v248, %v269
      %271 = vst [vmem:[#allocation2 + $0x14] sm:$0x1] %v270
      %v272 = vld [vmem:[#allocation2] sm:$0xf]
      %v273 = vld [vmem:[#allocation2 + $0x4] sm:$0xf]
      %v274 = vld [vmem:[#allocation2 + $0xc] sm:$0xf]
      %v275 = vld [vmem:[#allocation2 + $0x10] sm:$0xf]
      %v276 = vld [vmem:[%s1] sm:$0xf]
      %v277 = vld [vmem:[%s1 + $0x4] sm:$0xf]
      %v278 = vld [vmem:[%s1 + $0x8] sm:$0xf]
      %v279 = vld [vmem:[%s1 + $0xc] sm:$0xf]
      %v280 = vld [vmem:[%s1 + $0x10] sm:$0xf]
      %v281 = vld [vmem:[%s1 + $0x14] sm:$0xf]
      %v282 = vld [vmem:[%s1 + $0x18] sm:$0xf]
      %v283 = vld [vmem:[%s1 + $0x1c] sm:$0xf]
      %v284 = vld [vmem:[#allocation2 + $0x8] sm:$0x1]
      %v285 = vld [vmem:[#allocation2 + $0x14] sm:$0x1]
      %vm286 = vsmask.f32 3328
      %vm287 = vsmask.f32 7440
      %vm288 = vmor %vm286, %vm287
      %v290 = vshrl.u32 %v272, 16
      %v292 = vrot.slane %v290, 4
      %v293 = vshll.u32 %v272, 16
      %v295 = vrot.slane %v293, 5
      %v296 = vor.u32 %v292, %v295
      %v297 = vrot.slane %v296, 4
      %v299 = vshll.u32 %v273, 16
      %v301 = vrot.slane %v299, 5
      %v302 = vsel %vm288, %v297, %v301
      %v303 = vshrl.u32 %v273, 16
      %v305 = vrot.slane %v303, 4
      %v306 = vor.u32 %v305, %v301
      %v307 = vrot.slane %v306, 4
      %v309 = vshll.u32 %v284, 16
      %v311 = vrot.slane %v309, 5
      %v312 = vsel %vm288, %v307, %v311
      %v314 = vshrl.u32 %v274, 16
      %v316 = vrot.slane %v314, 4
      %v317 = vshll.u32 %v274, 16
      %v319 = vrot.slane %v317, 5
      %v320 = vor.u32 %v316, %v319
      %v321 = vrot.slane %v320, 4
      %v323 = vshll.u32 %v275, 16
      %v325 = vrot.slane %v323, 5
      %v326 = vsel %vm288, %v321, %v325
      %v327 = vshrl.u32 %v275, 16
      %v329 = vrot.slane %v327, 4
      %v330 = vor.u32 %v329, %v325
      %v331 = vrot.slane %v330, 4
      %v333 = vshll.u32 %v285, 16
      %v335 = vrot.slane %v333, 5
      %v336 = vsel %vm288, %v331, %v335
      %s337 = scalar_lea.vmem %s1, 32
      %v338 = vld [vmem:[%s337] sm:$0xf]
      %v339 = vld [vmem:[%s337 + $0x4] sm:$0xf]
      %v340 = vld [vmem:[%s337 + $0x8] sm:$0xf]
      %v341 = vld [vmem:[%s337 + $0xc] sm:$0xf]
      %v342 = vld [vmem:[%s337 + $0x10] sm:$0xf]
      %v343 = vld [vmem:[%s337 + $0x14] sm:$0xf]
      %v344 = vld [vmem:[%s337 + $0x18] sm:$0xf]
      %v345 = vld [vmem:[%s337 + $0x1c] sm:$0xf]
      %v346 = vunpack.c.l.b16 %v302
      %v347 = vunpack.c.l.b16 %v312
      %v348 = vunpack.c.l.b16 %v326
      %v349 = vunpack.c.l.b16 %v336
      %v350 = vpack.c.b16 %v347, %v346
      %v351 = vpack.c.b16 %v349, %v348
      %v360 = vunpack.c.l.b16 %v338
      %v361 = vunpack.c.l.b16 %v339
      %v362 = vunpack.c.l.b16 %v340
      %v363 = vunpack.c.l.b16 %v341
      %v364 = vunpack.c.l.b16 %v342
      %v365 = vunpack.c.l.b16 %v343
      %v366 = vunpack.c.l.b16 %v344
      %v367 = vunpack.c.l.b16 %v345
      %v368 = vpack.c.b16 %v361, %v360
      %v369 = vpack.c.b16 %v363, %v362
      %v370 = vpack.c.b16 %v365, %v364
      %v371 = vpack.c.b16 %v367, %v366
      %vm376 = vcmask 523264
      %v378 = vsel %vm376, %v350, 0
      %v381 = vsel %vm376, %v351, 0
      %383 = vmatprep.subr.bf16.mxu0 0
      %384 = vmatpush1.bf16.msra.mxu0 %v368
      %385 = vmatprep.subr.bf16.mxu0 0
      %386 = vmatpush1.bf16.msra.mxu0 %v369
      %387 = vmatprep.subr.bf16.mxu0 0
      %388 = vmatpush1.bf16.msra.mxu0 %v370
      %389 = vmatprep.subr.bf16.mxu0 0
      %390 = vmatpush1.bf16.msra.mxu0 %v371
      %391 = vmatprep.subr.bf16.mxu0 0
      %392 = vmatpush1.bf16.msra.mxu0 0
      %393 = vmatprep.subr.bf16.mxu0 0
      %394 = vmatpush1.bf16.msra.mxu0 0
      %395 = vmatprep.subr.bf16.mxu0 0
      %396 = vmatpush1.bf16.msra.mxu0 0
      %397 = vmatprep.subr.bf16.mxu0 0
      %398 = vmatpush1.bf16.msra.mxu0 0
      %399 = vmatprep.subr.bf16.mxu0 0
      %400 = vmatpush1.bf16.msra.mxu0 0
      %401 = vmatprep.subr.bf16.mxu0 0
      %402 = vmatpush1.bf16.msra.mxu0 0
      %403 = vmatprep.subr.bf16.mxu0 0
      %404 = vmatpush1.bf16.msra.mxu0 0
      %405 = vmatprep.subr.bf16.mxu0 0
      %406 = vmatpush1.bf16.msra.mxu0 0
      %407 = vmatprep.subr.bf16.mxu0 0
      %408 = vmatpush1.bf16.msra.mxu0 0
      %409 = vmatprep.subr.bf16.mxu0 0
      %410 = vmatpush1.bf16.msra.mxu0 0
      %411 = vmatprep.subr.bf16.mxu0 0
      %412 = vmatpush1.bf16.msra.mxu0 0
      %413 = vmatprep.subr.bf16.mxu0 0
      %414 = vmatpush1.bf16.msra.mxu0 0
      %415 = vmatprep.mubr.bf16.mxu0 0
      %416 = vmatmul.mubr.bf16.gmra.mrb[0].mxu0 %v378
      %v417 = vpop.f32.mrb[0].mxu0
      %v418 = vadd.f32 0.0, %v417
      %v419 = vpop.f32.mrb[0].mxu0
      %v420 = vpop.f32.mrb[0].mxu0
      %v421 = vadd.f32 0.0, %v420
      %v422 = vpop.f32.mrb[0].mxu0
      %423 = vmatprep.mubr.bf16.mxu0 0
      %424 = vmatmul.mubr.bf16.gmra.mrb[0].mxu0 %v381
      %v425 = vpop.f32.mrb[0].mxu0
      %v426 = vadd.f32 0.0, %v425
      %v427 = vpop.f32.mrb[0].mxu0
      %v428 = vpop.f32.mrb[0].mxu0
      %v429 = vadd.f32 0.0, %v428
      %v430 = vpop.f32.mrb[0].mxu0
      %431 = vdwg.mxu0
      %v436 = vunpack.c.l.b16 %v272
      %v437 = vunpack.c.l.b16 %v273
      %v438 = vunpack.c.l.b16 %v274
      %v439 = vunpack.c.l.b16 %v275
      %v440 = vpack.c.b16 %v437, %v436
      %v441 = vpack.c.b16 %v439, %v438
      %v450 = vunpack.c.l.b16 %v276
      %v451 = vunpack.c.l.b16 %v277
      %v452 = vunpack.c.l.b16 %v278
      %v453 = vunpack.c.l.b16 %v279
      %v454 = vunpack.c.l.b16 %v280
      %v455 = vunpack.c.l.b16 %v281
      %v456 = vunpack.c.l.b16 %v282
      %v457 = vunpack.c.l.b16 %v283
      %v458 = vpack.c.b16 %v451, %v450
      %v459 = vpack.c.b16 %v453, %v452
      %v460 = vpack.c.b16 %v455, %v454
      %v461 = vpack.c.b16 %v457, %v456
      %v467 = vsel %vm376, %v440, 0
      %v470 = vsel %vm376, %v441, 0
      %472 = vmatprep.subr.bf16.mxu0 0
      %473 = vmatpush1.bf16.msra.mxu0 %v458
      %474 = vmatprep.subr.bf16.mxu0 0
      %475 = vmatpush1.bf16.msra.mxu0 %v459
      %476 = vmatprep.subr.bf16.mxu0 0
      %477 = vmatpush1.bf16.msra.mxu0 %v460
      %478 = vmatprep.subr.bf16.mxu0 0
      %479 = vmatpush1.bf16.msra.mxu0 %v461
      %480 = vmatprep.subr.bf16.mxu0 0
      %481 = vmatpush1.bf16.msra.mxu0 0
      %482 = vmatprep.subr.bf16.mxu0 0
      %483 = vmatpush1.bf16.msra.mxu0 0
      %484 = vmatprep.subr.bf16.mxu0 0
      %485 = vmatpush1.bf16.msra.mxu0 0
      %486 = vmatprep.subr.bf16.mxu0 0
      %487 = vmatpush1.bf16.msra.mxu0 0
      %488 = vmatprep.subr.bf16.mxu0 0
      %489 = vmatpush1.bf16.msra.mxu0 0
      %490 = vmatprep.subr.bf16.mxu0 0
      %491 = vmatpush1.bf16.msra.mxu0 0
      %492 = vmatprep.subr.bf16.mxu0 0
      %493 = vmatpush1.bf16.msra.mxu0 0
      %494 = vmatprep.subr.bf16.mxu0 0
      %495 = vmatpush1.bf16.msra.mxu0 0
      %496 = vmatprep.subr.bf16.mxu0 0
      %497 = vmatpush1.bf16.msra.mxu0 0
      %498 = vmatprep.subr.bf16.mxu0 0
      %499 = vmatpush1.bf16.msra.mxu0 0
      %500 = vmatprep.subr.bf16.mxu0 0
      %501 = vmatpush1.bf16.msra.mxu0 0
      %502 = vmatprep.subr.bf16.mxu0 0
      %503 = vmatpush1.bf16.msra.mxu0 0
      %504 = vmatprep.mubr.bf16.mxu0 0
      %505 = vmatmul.mubr.bf16.gmra.mrb[0].mxu0 %v467
      %v506 = vpop.f32.mrb[0].mxu0
      %v507 = vadd.f32 %v418, %v506
      %v508 = vpop.f32.mrb[0].mxu0
      %v509 = vpop.f32.mrb[0].mxu0
      %v510 = vadd.f32 %v421, %v509
      %v511 = vpop.f32.mrb[0].mxu0
      %512 = vmatprep.mubr.bf16.mxu0 0
      %513 = vmatmul.mubr.bf16.gmra.mrb[0].mxu0 %v470
      %v514 = vpop.f32.mrb[0].mxu0
      %v515 = vadd.f32 %v426, %v514
      %v516 = vpop.f32.mrb[0].mxu0
      %v517 = vpop.f32.mrb[0].mxu0
      %v518 = vadd.f32 %v429, %v517
      %v519 = vpop.f32.mrb[0].mxu0
      %520 = vdwg.mxu0
      %v521 = vld [vmem:[#allocation2] sm:$0xe]
      %v522 = vld [vmem:[#allocation2 + $0xc] sm:$0xe]
      %vm527 = vcmask 1042432
      %vm528 = vcmask 1046532
      %vm529 = vmor %vm527, %vm528
      %v530 = vrot.slane %v521, 5
      %v531 = vrot.slane %v530, 4
      %v532 = vrot.slane %v273, 5
      %v533 = vsel %vm529, %v531, %v532
      %v534 = vrot.slane %v532, 4
      %v535 = vrot.slane %v284, 5
      %v536 = vsel %vm529, %v534, %v535
      %v537 = vrot.slane %v522, 5
      %v538 = vrot.slane %v537, 4
      %v539 = vrot.slane %v275, 5
      %v540 = vsel %vm529, %v538, %v539
      %v541 = vrot.slane %v539, 4
      %v542 = vrot.slane %v285, 5
      %v543 = vsel %vm529, %v541, %v542
      %s544 = scalar_lea.vmem %s1, 64
      %v545 = vld [vmem:[%s544] sm:$0xf]
      %v546 = vld [vmem:[%s544 + $0x4] sm:$0xf]
      %v547 = vld [vmem:[%s544 + $0x8] sm:$0xf]
      %v548 = vld [vmem:[%s544 + $0xc] sm:$0xf]
      %v549 = vld [vmem:[%s544 + $0x10] sm:$0xf]
      %v550 = vld [vmem:[%s544 + $0x14] sm:$0xf]
      %v551 = vld [vmem:[%s544 + $0x18] sm:$0xf]
      %v552 = vld [vmem:[%s544 + $0x1c] sm:$0xf]
      %v553 = vunpack.c.l.b16 %v533
      %v554 = vunpack.c.l.b16 %v536
      %v555 = vunpack.c.l.b16 %v540
      %v556 = vunpack.c.l.b16 %v543
      %v557 = vpack.c.b16 %v554, %v553
      %v558 = vpack.c.b16 %v556, %v555
      %v567 = vunpack.c.l.b16 %v545
      %v568 = vunpack.c.l.b16 %v546
      %v569 = vunpack.c.l.b16 %v547
      %v570 = vunpack.c.l.b16 %v548
      %v571 = vunpack.c.l.b16 %v549
      %v572 = vunpack.c.l.b16 %v550
      %v573 = vunpack.c.l.b16 %v551
      %v574 = vunpack.c.l.b16 %v552
      %v575 = vpack.c.b16 %v568, %v567
      %v576 = vpack.c.b16 %v570, %v569
      %v577 = vpack.c.b16 %v572, %v571
      %v578 = vpack.c.b16 %v574, %v573
      %v584 = vsel %vm376, %v557, 0
      %v587 = vsel %vm376, %v558, 0
      %589 = vmatprep.subr.bf16.mxu0 0
      %590 = vmatpush1.bf16.msra.mxu0 %v575
      %591 = vmatprep.subr.bf16.mxu0 0
      %592 = vmatpush1.bf16.msra.mxu0 %v576
      %593 = vmatprep.subr.bf16.mxu0 0
      %594 = vmatpush1.bf16.msra.mxu0 %v577
      %595 = vmatprep.subr.bf16.mxu0 0
      %596 = vmatpush1.bf16.msra.mxu0 %v578
      %597 = vmatprep.subr.bf16.mxu0 0
      %598 = vmatpush1.bf16.msra.mxu0 0
      %599 = vmatprep.subr.bf16.mxu0 0
      %600 = vmatpush1.bf16.msra.mxu0 0
      %601 = vmatprep.subr.bf16.mxu0 0
      %602 = vmatpush1.bf16.msra.mxu0 0
      %603 = vmatprep.subr.bf16.mxu0 0
      %604 = vmatpush1.bf16.msra.mxu0 0
      %605 = vmatprep.subr.bf16.mxu0 0
      %606 = vmatpush1.bf16.msra.mxu0 0
      %607 = vmatprep.subr.bf16.mxu0 0
      %608 = vmatpush1.bf16.msra.mxu0 0
      %609 = vmatprep.subr.bf16.mxu0 0
      %610 = vmatpush1.bf16.msra.mxu0 0
      %611 = vmatprep.subr.bf16.mxu0 0
      %612 = vmatpush1.bf16.msra.mxu0 0
      %613 = vmatprep.subr.bf16.mxu0 0
      %614 = vmatpush1.bf16.msra.mxu0 0
      %615 = vmatprep.subr.bf16.mxu0 0
      %616 = vmatpush1.bf16.msra.mxu0 0
      %617 = vmatprep.subr.bf16.mxu0 0
      %618 = vmatpush1.bf16.msra.mxu0 0
      %619 = vmatprep.subr.bf16.mxu0 0
      %620 = vmatpush1.bf16.msra.mxu0 0
      %621 = vmatprep.mubr.bf16.mxu0 0
      %622 = vmatmul.mubr.bf16.gmra.mrb[0].mxu0 %v584
      %v623 = vpop.f32.mrb[0].mxu0
      %v624 = vadd.f32 0.0, %v623
      %v625 = vpop.f32.mrb[0].mxu0
      %v626 = vpop.f32.mrb[0].mxu0
      %v627 = vadd.f32 0.0, %v626
      %v628 = vpop.f32.mrb[0].mxu0
      %629 = vmatprep.mubr.bf16.mxu0 0
      %630 = vmatmul.mubr.bf16.gmra.mrb[0].mxu0 %v587
      %v631 = vpop.f32.mrb[0].mxu0
      %v632 = vadd.f32 0.0, %v631
      %v633 = vpop.f32.mrb[0].mxu0
      %v634 = vpop.f32.mrb[0].mxu0
      %v635 = vadd.f32 0.0, %v634
      %v636 = vpop.f32.mrb[0].mxu0
      %637 = vdwg.mxu0
      %v638 = vadd.f32 %v507, %v624
      %v639 = vadd.f32 %v510, %v627
      %v640 = vadd.f32 %v515, %v632
      %v641 = vadd.f32 %v518, %v635
      %v642 = vmax.f32 %v638, 0.0
      %v643 = vmax.f32 %v639, 0.0
      %v644 = vmax.f32 %v640, 0.0
      %v645 = vmax.f32 %v641, 0.0
      %v646 = vpack.c.bf16 %v643, %v642
      %v647 = vpack.c.bf16 %v645, %v644
      %v650 = vunpack.c.l.b16 %v646
      %v651 = vunpack.c.h.b16 %v646
      %v652 = vunpack.c.l.b16 %v647
      %v653 = vunpack.c.h.b16 %v647
      %v654 = vpack.c.b16 %v650, %v650
      %v655 = vpack.c.b16 %v651, %v651
      %v656 = vpack.c.b16 %v652, %v652
      %v657 = vpack.c.b16 %v653, %v653
      %v659 = vshrl.u32 %v654, 16
      %v661 = vrot.slane %v659, 7
      %v662 = vshll.u32 %v654, 16
      %v664 = vor.u32 %v661, %v662
      %v665 = vrot.slane %v661, 4
      %v667 = vshrl.u32 %v655, 16
      %v669 = vrot.slane %v667, 7
      %v670 = vshll.u32 %v655, 16
      %v672 = vor.u32 %v669, %v670
      %v673 = vsel %vm214, %v665, %v672
      %v674 = vrot.slane %v669, 4
      %v676 = vshrl.u32 %v656, 16
      %v678 = vrot.slane %v676, 7
      %v679 = vshll.u32 %v656, 16
      %v681 = vor.u32 %v678, %v679
      %v682 = vrot.slane %v678, 4
      %v684 = vshrl.u32 %v657, 16
      %v686 = vrot.slane %v684, 7
      %v687 = vshll.u32 %v657, 16
      %v689 = vor.u32 %v686, %v687
      %v690 = vsel %vm214, %v682, %v689
      %v691 = vrot.slane %v686, 4
      %v698 = vld [vmem:[#allocation3] sm:$0xf]
      %v699 = vsel %vm256, %v664, %v698
      %700 = vst [vmem:[#allocation3] sm:$0xf] %v699
      %701 = vst.msk [vmem:[#allocation3 + $0x4] sm:$0xf] %vm260, %v673
      %v702 = vld [vmem:[#allocation3 + $0x8] sm:$0x1]
      %v703 = vsel %vm182, %v674, %v702
      %704 = vst [vmem:[#allocation3 + $0x8] sm:$0x1] %v703
      %v705 = vld [vmem:[#allocation3 + $0xc] sm:$0xf]
      %v706 = vsel %vm256, %v681, %v705
      %707 = vst [vmem:[#allocation3 + $0xc] sm:$0xf] %v706
      %708 = vst.msk [vmem:[#allocation3 + $0x10] sm:$0xf] %vm260, %v690
      %v709 = vld [vmem:[#allocation3 + $0x14] sm:$0x1]
      %v710 = vsel %vm182, %v691, %v709
      %711 = vst [vmem:[#allocation3 + $0x14] sm:$0x1] %v710
      %v712 = vld [vmem:[#allocation3] sm:$0xf]
      %v713 = vld [vmem:[#allocation3 + $0x4] sm:$0xf]
      %v714 = vld [vmem:[#allocation3 + $0xc] sm:$0xf]
      %v715 = vld [vmem:[#allocation3 + $0x10] sm:$0xf]
      %v716 = vld [vmem:[%s2] sm:$0xf]
      %v717 = vld [vmem:[%s2 + $0x4] sm:$0xf]
      %v718 = vld [vmem:[%s2 + $0x8] sm:$0xf]
      %v719 = vld [vmem:[%s2 + $0xc] sm:$0xf]
      %v720 = vld [vmem:[%s2 + $0x10] sm:$0xf]
      %v721 = vld [vmem:[%s2 + $0x14] sm:$0xf]
      %v722 = vld [vmem:[%s2 + $0x18] sm:$0xf]
      %v723 = vld [vmem:[%s2 + $0x1c] sm:$0xf]
      %v724 = vld [vmem:[#allocation3 + $0x8] sm:$0x1]
      %v725 = vld [vmem:[#allocation3 + $0x14] sm:$0x1]
      %v727 = vshrl.u32 %v712, 16
      %v729 = vrot.slane %v727, 4
      %v730 = vshll.u32 %v712, 16
      %v732 = vrot.slane %v730, 5
      %v733 = vor.u32 %v729, %v732
      %v734 = vrot.slane %v733, 4
      %v736 = vshll.u32 %v713, 16
      %v738 = vrot.slane %v736, 5
      %v739 = vsel %vm288, %v734, %v738
      %v740 = vshrl.u32 %v713, 16
      %v742 = vrot.slane %v740, 4
      %v743 = vor.u32 %v742, %v738
      %v744 = vrot.slane %v743, 4
      %v746 = vshll.u32 %v724, 16
      %v748 = vrot.slane %v746, 5
      %v749 = vsel %vm288, %v744, %v748
      %v751 = vshrl.u32 %v714, 16
      %v753 = vrot.slane %v751, 4
      %v754 = vshll.u32 %v714, 16
      %v756 = vrot.slane %v754, 5
      %v757 = vor.u32 %v753, %v756
      %v758 = vrot.slane %v757, 4
      %v760 = vshll.u32 %v715, 16
      %v762 = vrot.slane %v760, 5
      %v763 = vsel %vm288, %v758, %v762
      %v764 = vshrl.u32 %v715, 16
      %v766 = vrot.slane %v764, 4
      %v767 = vor.u32 %v766, %v762
      %v768 = vrot.slane %v767, 4
      %v770 = vshll.u32 %v725, 16
      %v772 = vrot.slane %v770, 5
      %v773 = vsel %vm288, %v768, %v772
      %s774 = scalar_lea.vmem %s2, 32
      %v775 = vld [vmem:[%s774] sm:$0xf]
      %v776 = vld [vmem:[%s774 + $0x4] sm:$0xf]
      %v777 = vld [vmem:[%s774 + $0x8] sm:$0xf]
      %v778 = vld [vmem:[%s774 + $0xc] sm:$0xf]
      %v779 = vld [vmem:[%s774 + $0x10] sm:$0xf]
      %v780 = vld [vmem:[%s774 + $0x14] sm:$0xf]
      %v781 = vld [vmem:[%s774 + $0x18] sm:$0xf]
      %v782 = vld [vmem:[%s774 + $0x1c] sm:$0xf]
      %v783 = vunpack.c.l.b16 %v739
      %v784 = vunpack.c.l.b16 %v749
      %v785 = vunpack.c.l.b16 %v763
      %v786 = vunpack.c.l.b16 %v773
      %v787 = vpack.c.b16 %v784, %v783
      %v788 = vpack.c.b16 %v786, %v785
      %v797 = vunpack.c.l.b16 %v775
      %v798 = vunpack.c.l.b16 %v776
      %v799 = vunpack.c.l.b16 %v777
      %v800 = vunpack.c.l.b16 %v778
      %v801 = vunpack.c.l.b16 %v779
      %v802 = vunpack.c.l.b16 %v780
      %v803 = vunpack.c.l.b16 %v781
      %v804 = vunpack.c.l.b16 %v782
      %v805 = vpack.c.b16 %v798, %v797
      %v806 = vpack.c.b16 %v800, %v799
      %v807 = vpack.c.b16 %v802, %v801
      %v808 = vpack.c.b16 %v804, %v803
      %v814 = vsel %vm376, %v787, 0
      %v817 = vsel %vm376, %v788, 0
      %819 = vmatprep.subr.bf16.mxu0 0
      %820 = vmatpush1.bf16.msra.mxu0 %v805
      %821 = vmatprep.subr.bf16.mxu0 0
      %822 = vmatpush1.bf16.msra.mxu0 %v806
      %823 = vmatprep.subr.bf16.mxu0 0
      %824 = vmatpush1.bf16.msra.mxu0 %v807
      %825 = vmatprep.subr.bf16.mxu0 0
      %826 = vmatpush1.bf16.msra.mxu0 %v808
      %827 = vmatprep.subr.bf16.mxu0 0
      %828 = vmatpush1.bf16.msra.mxu0 0
      %829 = vmatprep.subr.bf16.mxu0 0
      %830 = vmatpush1.bf16.msra.mxu0 0
      %831 = vmatprep.subr.bf16.mxu0 0
      %832 = vmatpush1.bf16.msra.mxu0 0
      %833 = vmatprep.subr.bf16.mxu0 0
      %834 = vmatpush1.bf16.msra.mxu0 0
      %835 = vmatprep.subr.bf16.mxu0 0
      %836 = vmatpush1.bf16.msra.mxu0 0
      %837 = vmatprep.subr.bf16.mxu0 0
      %838 = vmatpush1.bf16.msra.mxu0 0
      %839 = vmatprep.subr.bf16.mxu0 0
      %840 = vmatpush1.bf16.msra.mxu0 0
      %841 = vmatprep.subr.bf16.mxu0 0
      %842 = vmatpush1.bf16.msra.mxu0 0
      %843 = vmatprep.subr.bf16.mxu0 0
      %844 = vmatpush1.bf16.msra.mxu0 0
      %845 = vmatprep.subr.bf16.mxu0 0
      %846 = vmatpush1.bf16.msra.mxu0 0
      %847 = vmatprep.subr.bf16.mxu0 0
      %848 = vmatpush1.bf16.msra.mxu0 0
      %849 = vmatprep.subr.bf16.mxu0 0
      %850 = vmatpush1.bf16.msra.mxu0 0
      %851 = vmatprep.mubr.bf16.mxu0 0
      %852 = vmatmul.mubr.bf16.gmra.mrb[0].mxu0 %v814
      %v853 = vpop.f32.mrb[0].mxu0
      %v854 = vadd.f32 0.0, %v853
      %v855 = vpop.f32.mrb[0].mxu0
      %v856 = vpop.f32.mrb[0].mxu0
      %v857 = vadd.f32 0.0, %v856
      %v858 = vpop.f32.mrb[0].mxu0
      %859 = vmatprep.mubr.bf16.mxu0 0
      %860 = vmatmul.mubr.bf16.gmra.mrb[0].mxu0 %v817
      %v861 = vpop.f32.mrb[0].mxu0
      %v862 = vadd.f32 0.0, %v861
      %v863 = vpop.f32.mrb[0].mxu0
      %v864 = vpop.f32.mrb[0].mxu0
      %v865 = vadd.f32 0.0, %v864
      %v866 = vpop.f32.mrb[0].mxu0
      %867 = vdwg.mxu0
      %v872 = vunpack.c.l.b16 %v712
      %v873 = vunpack.c.l.b16 %v713
      %v874 = vunpack.c.l.b16 %v714
      %v875 = vunpack.c.l.b16 %v715
      %v876 = vpack.c.b16 %v873, %v872
      %v877 = vpack.c.b16 %v875, %v874
      %v886 = vunpack.c.l.b16 %v716
      %v887 = vunpack.c.l.b16 %v717
      %v888 = vunpack.c.l.b16 %v718
      %v889 = vunpack.c.l.b16 %v719
      %v890 = vunpack.c.l.b16 %v720
      %v891 = vunpack.c.l.b16 %v721
      %v892 = vunpack.c.l.b16 %v722
      %v893 = vunpack.c.l.b16 %v723
      %v894 = vpack.c.b16 %v887, %v886
      %v895 = vpack.c.b16 %v889, %v888
      %v896 = vpack.c.b16 %v891, %v890
      %v897 = vpack.c.b16 %v893, %v892
      %v903 = vsel %vm376, %v876, 0
      %v906 = vsel %vm376, %v877, 0
      %908 = vmatprep.subr.bf16.mxu0 0
      %909 = vmatpush1.bf16.msra.mxu0 %v894
      %910 = vmatprep.subr.bf16.mxu0 0
      %911 = vmatpush1.bf16.msra.mxu0 %v895
      %912 = vmatprep.subr.bf16.mxu0 0
      %913 = vmatpush1.bf16.msra.mxu0 %v896
      %914 = vmatprep.subr.bf16.mxu0 0
      %915 = vmatpush1.bf16.msra.mxu0 %v897
      %916 = vmatprep.subr.bf16.mxu0 0
      %917 = vmatpush1.bf16.msra.mxu0 0
      %918 = vmatprep.subr.bf16.mxu0 0
      %919 = vmatpush1.bf16.msra.mxu0 0
      %920 = vmatprep.subr.bf16.mxu0 0
      %921 = vmatpush1.bf16.msra.mxu0 0
      %922 = vmatprep.subr.bf16.mxu0 0
      %923 = vmatpush1.bf16.msra.mxu0 0
      %924 = vmatprep.subr.bf16.mxu0 0
      %925 = vmatpush1.bf16.msra.mxu0 0
      %926 = vmatprep.subr.bf16.mxu0 0
      %927 = vmatpush1.bf16.msra.mxu0 0
      %928 = vmatprep.subr.bf16.mxu0 0
      %929 = vmatpush1.bf16.msra.mxu0 0
      %930 = vmatprep.subr.bf16.mxu0 0
      %931 = vmatpush1.bf16.msra.mxu0 0
      %932 = vmatprep.subr.bf16.mxu0 0
      %933 = vmatpush1.bf16.msra.mxu0 0
      %934 = vmatprep.subr.bf16.mxu0 0
      %935 = vmatpush1.bf16.msra.mxu0 0
      %936 = vmatprep.subr.bf16.mxu0 0
      %937 = vmatpush1.bf16.msra.mxu0 0
      %938 = vmatprep.subr.bf16.mxu0 0
      %939 = vmatpush1.bf16.msra.mxu0 0
      %940 = vmatprep.mubr.bf16.mxu0 0
      %941 = vmatmul.mubr.bf16.gmra.mrb[0].mxu0 %v903
      %v942 = vpop.f32.mrb[0].mxu0
      %v943 = vadd.f32 %v854, %v942
      %v944 = vpop.f32.mrb[0].mxu0
      %v945 = vpop.f32.mrb[0].mxu0
      %v946 = vadd.f32 %v857, %v945
      %v947 = vpop.f32.mrb[0].mxu0
      %948 = vmatprep.mubr.bf16.mxu0 0
      %949 = vmatmul.mubr.bf16.gmra.mrb[0].mxu0 %v906
      %v950 = vpop.f32.mrb[0].mxu0
      %v951 = vadd.f32 %v862, %v950
      %v952 = vpop.f32.mrb[0].mxu0
      %v953 = vpop.f32.mrb[0].mxu0
      %v954 = vadd.f32 %v865, %v953
      %v955 = vpop.f32.mrb[0].mxu0
      %956 = vdwg.mxu0
      %v957 = vld [vmem:[#allocation3] sm:$0xe]
      %v958 = vld [vmem:[#allocation3 + $0xc] sm:$0xe]
      %v963 = vrot.slane %v957, 5
      %v964 = vrot.slane %v963, 4
      %v965 = vrot.slane %v713, 5
      %v966 = vsel %vm529, %v964, %v965
      %v967 = vrot.slane %v965, 4
      %v968 = vrot.slane %v724, 5
      %v969 = vsel %vm529, %v967, %v968
      %v970 = vrot.slane %v958, 5
      %v971 = vrot.slane %v970, 4
      %v972 = vrot.slane %v715, 5
      %v973 = vsel %vm529, %v971, %v972
      %v974 = vrot.slane %v972, 4
      %v975 = vrot.slane %v725, 5
      %v976 = vsel %vm529, %v974, %v975
      %s977 = scalar_lea.vmem %s2, 64
      %v978 = vld [vmem:[%s977] sm:$0xf]
      %v979 = vld [vmem:[%s977 + $0x4] sm:$0xf]
      %v980 = vld [vmem:[%s977 + $0x8] sm:$0xf]
      %v981 = vld [vmem:[%s977 + $0xc] sm:$0xf]
      %v982 = vld [vmem:[%s977 + $0x10] sm:$0xf]
      %v983 = vld [vmem:[%s977 + $0x14] sm:$0xf]
      %v984 = vld [vmem:[%s977 + $0x18] sm:$0xf]
      %v985 = vld [vmem:[%s977 + $0x1c] sm:$0xf]
      %v986 = vunpack.c.l.b16 %v966
      %v987 = vunpack.c.l.b16 %v969
      %v988 = vunpack.c.l.b16 %v973
      %v989 = vunpack.c.l.b16 %v976
      %v990 = vpack.c.b16 %v987, %v986
      %v991 = vpack.c.b16 %v989, %v988
      %v1000 = vunpack.c.l.b16 %v978
      %v1001 = vunpack.c.l.b16 %v979
      %v1002 = vunpack.c.l.b16 %v980
      %v1003 = vunpack.c.l.b16 %v981
      %v1004 = vunpack.c.l.b16 %v982
      %v1005 = vunpack.c.l.b16 %v983
      %v1006 = vunpack.c.l.b16 %v984
      %v1007 = vunpack.c.l.b16 %v985
      %v1008 = vpack.c.b16 %v1001, %v1000
      %v1009 = vpack.c.b16 %v1003, %v1002
      %v1010 = vpack.c.b16 %v1005, %v1004
      %v1011 = vpack.c.b16 %v1007, %v1006
      %v1017 = vsel %vm376, %v990, 0
      %v1020 = vsel %vm376, %v991, 0
      %1022 = vmatprep.subr.bf16.mxu0 0
      %1023 = vmatpush1.bf16.msra.mxu0 %v1008
      %1024 = vmatprep.subr.bf16.mxu0 0
      %1025 = vmatpush1.bf16.msra.mxu0 %v1009
      %1026 = vmatprep.subr.bf16.mxu0 0
      %1027 = vmatpush1.bf16.msra.mxu0 %v1010
      %1028 = vmatprep.subr.bf16.mxu0 0
      %1029 = vmatpush1.bf16.msra.mxu0 %v1011
      %1030 = vmatprep.subr.bf16.mxu0 0
      %1031 = vmatpush1.bf16.msra.mxu0 0
      %1032 = vmatprep.subr.bf16.mxu0 0
      %1033 = vmatpush1.bf16.msra.mxu0 0
      %1034 = vmatprep.subr.bf16.mxu0 0
      %1035 = vmatpush1.bf16.msra.mxu0 0
      %1036 = vmatprep.subr.bf16.mxu0 0
      %1037 = vmatpush1.bf16.msra.mxu0 0
      %1038 = vmatprep.subr.bf16.mxu0 0
      %1039 = vmatpush1.bf16.msra.mxu0 0
      %1040 = vmatprep.subr.bf16.mxu0 0
      %1041 = vmatpush1.bf16.msra.mxu0 0
      %1042 = vmatprep.subr.bf16.mxu0 0
      %1043 = vmatpush1.bf16.msra.mxu0 0
      %1044 = vmatprep.subr.bf16.mxu0 0
      %1045 = vmatpush1.bf16.msra.mxu0 0
      %1046 = vmatprep.subr.bf16.mxu0 0
      %1047 = vmatpush1.bf16.msra.mxu0 0
      %1048 = vmatprep.subr.bf16.mxu0 0
      %1049 = vmatpush1.bf16.msra.mxu0 0
      %1050 = vmatprep.subr.bf16.mxu0 0
      %1051 = vmatpush1.bf16.msra.mxu0 0
      %1052 = vmatprep.subr.bf16.mxu0 0
      %1053 = vmatpush1.bf16.msra.mxu0 0
      %1054 = vmatprep.mubr.bf16.mxu0 0
      %1055 = vmatmul.mubr.bf16.gmra.mrb[0].mxu0 %v1017
      %v1056 = vpop.f32.mrb[0].mxu0
      %v1057 = vadd.f32 0.0, %v1056
      %v1058 = vpop.f32.mrb[0].mxu0
      %v1059 = vpop.f32.mrb[0].mxu0
      %v1060 = vadd.f32 0.0, %v1059
      %v1061 = vpop.f32.mrb[0].mxu0
      %1062 = vmatprep.mubr.bf16.mxu0 0
      %1063 = vmatmul.mubr.bf16.gmra.mrb[0].mxu0 %v1020
      %v1064 = vpop.f32.mrb[0].mxu0
      %v1065 = vadd.f32 0.0, %v1064
      %v1066 = vpop.f32.mrb[0].mxu0
      %v1067 = vpop.f32.mrb[0].mxu0
      %v1068 = vadd.f32 0.0, %v1067
      %v1069 = vpop.f32.mrb[0].mxu0
      %1070 = vdwg.mxu0
      %v1071 = vadd.f32 %v943, %v1057
      %v1072 = vadd.f32 %v946, %v1060
      %v1073 = vadd.f32 %v951, %v1065
      %v1074 = vadd.f32 %v954, %v1068
      %v1075 = vld [vmem:[%s170] sm:$0xf]
      %v1076 = vld [vmem:[%s170 + $0x4] sm:$0xf]
      %v1077 = vld [vmem:[%s170 + $0x8] sm:$0xf]
      %v1078 = vld [vmem:[%s170 + $0xc] sm:$0xf]
      %v1079 = vunpack.c.l.bf16 %v1075
      %v1080 = vunpack.c.l.bf16 %v1076
      %v1081 = vunpack.c.l.bf16 %v1077
      %v1082 = vunpack.c.l.bf16 %v1078
      %v1083 = vadd.f32 %v1071, %v1079
      %v1084 = vadd.f32 %v1072, %v1080
      %v1085 = vadd.f32 %v1073, %v1081
      %v1086 = vadd.f32 %v1074, %v1082
      %v1087 = vmax.f32 %v1083, 0.0
      %v1088 = vmax.f32 %v1084, 0.0
      %v1089 = vmax.f32 %v1085, 0.0
      %v1090 = vmax.f32 %v1086, 0.0
      %1091 = vst.msk [vmem:[%s177] sm:$0xff] %vm376, %v1087
      %1092 = vst.msk [vmem:[%s177 + $0x8] sm:$0xff] %vm376, %v1088
      %1093 = vst.msk [vmem:[%s177 + $0x10] sm:$0xff] %vm376, %v1089
      %1094 = vst.msk [vmem:[%s177 + $0x18] sm:$0xff] %vm376, %v1090
      %s1095 = smul.u32 2, %s14
      %p1096 = scmp.lt.s32.totalorder %s1095, 3
      %s1097 = scalar_select %p1096, %s1095, 3
      %s1098 = smul.addr %s1097, 2
      %s1099 = smul.addr %s1098, 8
      %s1100 = scalar_lea.vmem %s3, %s1099
      // Predicated region
      $region33: #{basic_block_sub.1} parent=31 // pred_check
        %p1101 = pneg %p100
      $region34: #{basic_block_sub.1} parent=31 // pred_check_branch
        %1103 = sbr.rel (%p1101) target = $region36
      $region35: #{basic_block_sub.1} parent=31 // pred_region
        %s1104 = smul.u32 2, %s14
      $region36: #{basic_block_sub.1} parent=31 // pred_fallthru
        _
    $region32: #{basic_block_sub.1} parent=5 // pred_fallthru
      _
    %p1105 = scmp.le.s32.totalorder 2, %s9
    // Predicated region
    $region37: #{basic_block_sub.1} parent=5 // pred_check
      %p1106 = pneg %p1105
    $region38: #{basic_block_sub.1} parent=5 // pred_check_branch
      %1108 = sbr.rel (%p1106) target = $region40
    $region39: #{basic_block_sub.1} parent=5 // pred_region
      %s1109 = ssub.s32 %s9, 2
      // Predicated region
      $region41: #{basic_block_sub.1} parent=39 // pred_check
        %p1110 = pneg %p106
      $region42: #{basic_block_sub.1} parent=39 // pred_check_branch
        %1112 = sbr.rel (%p1110) target = $region44
      $region43: #{basic_block_sub.1} parent=39 // pred_region
        %s1113 = smul.u32 2, %s15
        %p1114 = scmp.lt.s32.totalorder %s1113, 3
        %s1115 = scalar_select %p1114, %s1113, 3
        %s1116 = smul.addr %s1115, 2
        %s1117 = smul.addr %s1116, 8
        %s1118 = scalar_lea.vmem %s3, %s1117
      $region44: #{basic_block_sub.1} parent=39 // pred_fallthru
        _
    $region40: #{basic_block_sub.1} parent=5 // pred_fallthru
      _
  $region6: #{basic_block_sub.1} parent=0 // loop_footer
    %s13 = sadd.s32 1, %s9
  $region7: #{basic_block_sub.1} parent=0 // loop_footer_branch
    %8 = sbr.rel target = $region3
  $region8: #{basic_block_sub.1} parent=0 // loop_exit
    _

</llo_original>
